<compile_context>
chip_gen: v7x
topology: tpu7x:2x2x1
jax: 0.10.0
libtpu: 0.0.40
codegen_flags: <defaults>
</compile_context>

<pallas_src>
import numpy as np
import jax
import jax.numpy as jnp
from jax.experimental import pallas as pl
from jax.experimental.pallas import tpu as pltpu

# Small, module-consistent shapes.
T, CIN, H, W = 2, 4, 16, 16      # T frames of (Cin, H, W) images (NCHW)
K = 3                            # conv kernel size (padding=1, stride=1)
CMID = 32                        # stand-in backbone width
FDIM = 128                       # feature dim produced by inference_forward_fast

HW = H * W                       # 256 spatial positions per frame
KKC = K * K * CIN                # 36 flattened patch width
LANE = 128
KKC_P = LANE                     # lane-padded patch width  (36 -> 128, zero pad)
CMID_P = LANE                    # lane-padded mid width    (32 -> 128, zero pad)


def _slm_kernel(p_ref, wc_ref, pool_ref, wf_ref, b_ref, o_ref):
    # p_ref   : (T*HW, KKC_P)  bf16  im2col patches, all frames stacked
    # wc_ref  : (KKC_P, CMID_P) bf16 conv weights (zero lane-padded)
    # pool_ref: (T, T*HW)      f32   block-diagonal 1/HW pooling matrix
    # wf_ref  : (CMID_P, FDIM) f32   FC weights (zero row-padded)
    # b_ref   : (1, FDIM)      f32   FC bias
    # o_ref   : (T, FDIM)      f32   L2-normalized per-frame features
    h = jnp.dot(p_ref[...], wc_ref[...],
                preferred_element_type=jnp.float32)                    # (T*HW, CMID_P)
    h = jnp.maximum(h, 0.0)                                            # ReLU (f32, VPU)
    pooled = jnp.dot(pool_ref[...], h,
                     preferred_element_type=jnp.float32)               # (T, CMID_P) avg pool on MXU
    feat = jnp.dot(pooled, wf_ref[...],
                   preferred_element_type=jnp.float32) + b_ref[...]    # (T, FDIM)
    # Fused F.normalize(dim=1, eps=1e-12): x / max(||x||, eps) == x * rsqrt(max(||x||^2, eps^2))
    ss = jnp.sum(feat * feat, axis=-1, keepdims=True)
    o_ref[...] = feat * jax.lax.rsqrt(jnp.maximum(ss, 1e-24))


def _im2col(x):
    # x: (T, CIN, H, W) NCHW  ->  (T, HW, K*K*CIN), patch order (dy, dx, cin).
    xp = jnp.pad(x, ((0, 0), (0, 0), (1, 1), (1, 1)))
    shifts = [xp[:, :, dy:dy + H, dx:dx + W] for dy in range(K) for dx in range(K)]
    p = jnp.stack(shifts, axis=1)                   # (T, K*K, CIN, H, W)
    p = jnp.transpose(p, (0, 3, 4, 1, 2))           # (T, H, W, K*K, CIN)
    return p.reshape(T, HW, KKC)


def slm_forward(x, w_conv, w_fc, b_fc):
    """Returns L2-normalized (T, 128) float32 features (cast to f64 by caller)."""
    # Host-side glue: im2col, lane padding, bf16 cast for MXU operands.
    patches = _im2col(x.astype(jnp.float32)).reshape(T * HW, KKC)
    patches = jnp.pad(patches, ((0, 0), (0, KKC_P - KKC))).astype(jnp.bfloat16)
    wc = jnp.pad(w_conv, ((0, KKC_P - KKC), (0, CMID_P - CMID))).astype(jnp.bfloat16)
    wf = jnp.pad(w_fc, ((0, CMID_P - CMID), (0, 0))).astype(jnp.float32)
    b = b_fc.astype(jnp.float32)
    # Block-diagonal per-frame mean-pooling matrix: (T, T*HW), rows of 1/HW.
    pool = jnp.kron(jnp.eye(T, dtype=jnp.float32),
                    jnp.full((1, HW), 1.0 / HW, jnp.float32))

    return pl.pallas_call(
        _slm_kernel,
        out_shape=jax.ShapeDtypeStruct((T, FDIM), jnp.float32),
        grid_spec=pltpu.PrefetchScalarGridSpec(
            num_scalar_prefetch=0,
            grid=(1,),                              # single fused program for all frames
            in_specs=[
                pl.BlockSpec((T * HW, KKC_P), lambda i: (0, 0)),
                pl.BlockSpec((KKC_P, CMID_P), lambda i: (0, 0)),
                pl.BlockSpec((T, T * HW), lambda i: (0, 0)),
                pl.BlockSpec((CMID_P, FDIM), lambda i: (0, 0)),
                pl.BlockSpec((1, FDIM), lambda i: (0, 0)),
            ],
            out_specs=pl.BlockSpec((T, FDIM), lambda i: (0, 0)),
        ),
        compiler_params=pltpu.CompilerParams(
            dimension_semantics=("arbitrary",)),
    )(patches, wc, pool, wf, b)


def _reference(x, w_conv, w_fc, b_fc):
    # Pure-JAX f32 reference of the same stand-in head (for a tolerance check).
    patches = _im2col(x.astype(jnp.float32))                 # (T, HW, KKC)
    h = jnp.maximum(jnp.einsum("thk,kc->thc", patches, w_conv), 0.0)
    pooled = jnp.mean(h, axis=1)                             # (T, CMID)
    feat = pooled @ w_fc + b_fc                              # (T, FDIM)
    nrm = jnp.sqrt(jnp.sum(feat * feat, axis=-1, keepdims=True))
    return feat / jnp.maximum(nrm, 1e-12)


if __name__ == "__main__":
    key = jax.random.PRNGKey(0)
    k_x, k_wc, k_wf, k_b = jax.random.split(key, 4)

    # Deterministic synthetic parameters (shapes implied by the stand-in head).
    w_conv = jax.random.normal(k_wc, (KKC, CMID), jnp.float32) * 0.1
    w_fc = jax.random.normal(k_wf, (CMID, FDIM), jnp.float32) * 0.1
    b_fc = jax.random.normal(k_b, (1, FDIM), jnp.float32) * 0.01

    # Input: T frames, NCHW, like the list of per-time numpy arrays in WrappedSLM.forward.
    x = jax.random.normal(k_x, (T, CIN, H, W), jnp.float32)

    feats = slm_forward(x, w_conv, w_fc, b_fc)
    feats = jax.block_until_ready(feats)

    # Mirror the module's output: float64 numpy, rows unit-norm.
    features_keep = np.asarray(feats, dtype=np.float64)
    assert features_keep.shape == (T, 128)
    assert np.all(np.isfinite(features_keep))
    row_norms = np.linalg.norm(features_keep, axis=1)
    assert np.allclose(row_norms, 1.0, atol=1e-5)

    # Tolerance check against the f32 reference (bf16 conv operands -> loose atol).
    ref = np.asarray(_reference(x, w_conv, w_fc, b_fc))
    assert np.allclose(features_keep, ref, atol=2e-2)

    print("KERNEL_OK")
</pallas_src>

<mosaic_0001>
module attributes {stable_mosaic.version = 11 : i64} {
  func.func @_slm_kernel(%arg0: i32, %arg1: memref<512x128xbf16, #tpu.memory_space<vmem>>, %arg2: memref<128x128xbf16, #tpu.memory_space<vmem>>, %arg3: memref<2x512xf32, #tpu.memory_space<vmem>>, %arg4: memref<128x128xf32, #tpu.memory_space<vmem>>, %arg5: memref<1x128xf32, #tpu.memory_space<vmem>>, %arg6: memref<2x128xf32, #tpu.memory_space<vmem>>) attributes {dimension_semantics = [#tpu.dimension_semantics<arbitrary>], iteration_bounds = array<i64: 1>, scalar_prefetch = 0 : i64, scratch_operands = 0 : i64, tpu.core_type = #tpu.core_type<tc>, window_params = [{pipeline_mode = #tpu.pipeline_mode<synchronous>, transform_indices = @transform_0, window_bounds = array<i64: 512, 128>}, {pipeline_mode = #tpu.pipeline_mode<synchronous>, transform_indices = @transform_1, window_bounds = array<i64: 128, 128>}, {pipeline_mode = #tpu.pipeline_mode<synchronous>, transform_indices = @transform_2, window_bounds = array<i64: 2, 512>}, {pipeline_mode = #tpu.pipeline_mode<synchronous>, transform_indices = @transform_3, window_bounds = array<i64: 128, 128>}, {pipeline_mode = #tpu.pipeline_mode<synchronous>, transform_indices = @transform_4, window_bounds = array<i64: 1, 128>}, {pipeline_mode = #tpu.pipeline_mode<synchronous>, transform_indices = @transform_5, window_bounds = array<i64: 2, 128>}]} {
    %c0 = arith.constant 0 : index
    %c0_0 = arith.constant 0 : index
    %0 = vector.load %arg1[%c0, %c0_0] : memref<512x128xbf16, #tpu.memory_space<vmem>>, vector<512x128xbf16>
    %c0_1 = arith.constant 0 : index
    %c0_2 = arith.constant 0 : index
    %1 = vector.load %arg2[%c0_1, %c0_2] : memref<128x128xbf16, #tpu.memory_space<vmem>>, vector<128x128xbf16>
    %cst = arith.constant dense<0.000000e+00> : vector<512x128xf32>
    %2 = tpu.matmul %0, %1, %cst {dimension_numbers = #tpu.dot_dimension_numbers<[1], [0], [0], [1], [0, 0, 1, 1], [], []>} : vector<512x128xbf16>, vector<128x128xbf16>, vector<512x128xf32> -> vector<512x128xf32>
    %cst_3 = arith.constant 0.000000e+00 : f32
    %3 = vector.broadcast %cst_3 : f32 to vector<512x128xf32>
    %4 = arith.maximumf %2, %3 : vector<512x128xf32>
    %c0_4 = arith.constant 0 : index
    %c0_5 = arith.constant 0 : index
    %5 = vector.load %arg3[%c0_4, %c0_5] : memref<2x512xf32, #tpu.memory_space<vmem>>, vector<2x512xf32>
    %cst_6 = arith.constant dense<0.000000e+00> : vector<2x128xf32>
    %6 = tpu.matmul %5, %4, %cst_6 {dimension_numbers = #tpu.dot_dimension_numbers<[1], [0], [0], [1], [0, 0, 1, 1], [], []>} : vector<2x512xf32>, vector<512x128xf32>, vector<2x128xf32> -> vector<2x128xf32>
    %c0_7 = arith.constant 0 : index
    %c0_8 = arith.constant 0 : index
    %7 = vector.load %arg4[%c0_7, %c0_8] : memref<128x128xf32, #tpu.memory_space<vmem>>, vector<128x128xf32>
    %cst_9 = arith.constant dense<0.000000e+00> : vector<2x128xf32>
    %8 = tpu.matmul %6, %7, %cst_9 {dimension_numbers = #tpu.dot_dimension_numbers<[1], [0], [0], [1], [0, 0, 1, 1], [], []>} : vector<2x128xf32>, vector<128x128xf32>, vector<2x128xf32> -> vector<2x128xf32>
    %c0_10 = arith.constant 0 : index
    %c0_11 = arith.constant 0 : index
    %9 = vector.load %arg5[%c0_10, %c0_11] : memref<1x128xf32, #tpu.memory_space<vmem>>, vector<1x128xf32>
    %10 = vector.broadcast %9 : vector<1x128xf32> to vector<2x128xf32>
    %11 = arith.addf %8, %10 : vector<2x128xf32>
    %12 = arith.mulf %11, %11 : vector<2x128xf32>
    %cst_12 = arith.constant dense<0.000000e+00> : vector<2xf32>
    %13 = vector.multi_reduction <add>, %12, %cst_12 [1] : vector<2x128xf32> to vector<2xf32>
    %14 = vector.shape_cast %13 : vector<2xf32> to vector<2x1xf32>
    %cst_13 = arith.constant 1.000000e-24 : f32
    %15 = vector.broadcast %cst_13 : f32 to vector<2x1xf32>
    %16 = arith.maximumf %14, %15 : vector<2x1xf32>
    %17 = math.rsqrt %16 : vector<2x1xf32>
    %18 = vector.broadcast %17 : vector<2x1xf32> to vector<2x128xf32>
    %19 = arith.mulf %11, %18 : vector<2x128xf32>
    %c0_14 = arith.constant 0 : index
    %c0_15 = arith.constant 0 : index
    %20 = vector.load %arg6[%c0_14, %c0_15] : memref<2x128xf32, #tpu.memory_space<vmem>>, vector<2x128xf32>
    tpu.vector_store %arg6[%c0_14, %c0_15], %19 {strides = array<i32>} : memref<2x128xf32, #tpu.memory_space<vmem>>, vector<2x128xf32>,
    return
  }
  func.func @transform_0(%arg0: i32) -> (i32, i32) {
    %c0_i32 = arith.constant 0 : i32
    %c0_i32_0 = arith.constant 0 : i32
    %c0_i32_1 = arith.constant 0 : i32
    return %c0_i32, %c0_i32_0 : i32, i32
  }
  func.func @transform_1(%arg0: i32) -> (i32, i32) {
    %c0_i32 = arith.constant 0 : i32
    %c0_i32_0 = arith.constant 0 : i32
    %c0_i32_1 = arith.constant 0 : i32
    return %c0_i32, %c0_i32_0 : i32, i32
  }
  func.func @transform_2(%arg0: i32) -> (i32, i32) {
    %c0_i32 = arith.constant 0 : i32
    %c0_i32_0 = arith.constant 0 : i32
    %c0_i32_1 = arith.constant 0 : i32
    return %c0_i32, %c0_i32_0 : i32, i32
  }
  func.func @transform_3(%arg0: i32) -> (i32, i32) {
    %c0_i32 = arith.constant 0 : i32
    %c0_i32_0 = arith.constant 0 : i32
    %c0_i32_1 = arith.constant 0 : i32
    return %c0_i32, %c0_i32_0 : i32, i32
  }
  func.func @transform_4(%arg0: i32) -> (i32, i32) {
    %c0_i32 = arith.constant 0 : i32
    %c0_i32_0 = arith.constant 0 : i32
    %c0_i32_1 = arith.constant 0 : i32
    return %c0_i32, %c0_i32_0 : i32, i32
  }
  func.func @transform_5(%arg0: i32) -> (i32, i32) {
    %c0_i32 = arith.constant 0 : i32
    %c0_i32_0 = arith.constant 0 : i32
    %c0_i32_1 = arith.constant 0 : i32
    return %c0_i32, %c0_i32_0 : i32, i32
  }
}

</mosaic_0001>

<llo_original>
// kernel: tpu_custom_call.1
$region0: #{tpu_custom_call.1}
  #allocation0 [shape = 'u32[]', space=smem, size = 0x4, offset = 0x4, fixed_abs, tag = 'smem constant byte address 0x4 - core index']
  #allocation1 [shape = 'u32[144,128]{1,0:T(1,128)}', space=vmem, size = 0x12000, scoped, tag = 'internal scratch']
  %s0 = inlined_call_operand.hbm [shape: bf16[512,128], index: 0, kind: input, shape index: {}]
  %s1 = inlined_call_operand.hbm [shape: bf16[128,128], index: 1, kind: input, shape index: {}]
  %s2 = inlined_call_operand.hbm [shape: f32[2,512], index: 2, kind: input, shape index: {}]
  %s3 = inlined_call_operand.hbm [shape: f32[128,128], index: 3, kind: input, shape index: {}]
  %s4 = inlined_call_operand.vmem [shape: f32[1,128], index: 4, kind: input, shape index: {}]
  %s5 = inlined_call_operand.hbm [shape: f32[2,128], index: 5, kind: output, shape index: {}]
  %s6 = sld [smem:[#allocation0]]
  $region46: #{tpu_custom_call.1} parent=0
    _
  %s8 = ssub.s32 1, %s6
  %s9 = scalar_select 0, %s8, %s6
  $region1: #{tpu_custom_call.1} parent=0
    #allocation2 [shape = 'u8[131072]{0}', space=vmem, size = 0x20000, scoped, tag = 'input window, operand 0, single buffered']
    #allocation3 [shape = 's32[1]{0}', space=sflag, size = 0x4, scoped, tag = 'scoped memory for tpu_custom_call.1']
    #allocation4 [shape = 's32[1]{0}', space=sflag, size = 0x4, scoped, tag = 'scoped memory for tpu_custom_call.1']
    #allocation5 [shape = 'u8[32768]{0}', space=vmem, size = 0x8000, scoped, tag = 'input window, operand 1, single buffered']
    #allocation6 [shape = 's32[1]{0}', space=sflag, size = 0x4, scoped, tag = 'scoped memory for tpu_custom_call.1']
    #allocation7 [shape = 'u8[4096]{0}', space=vmem, size = 0x1000, scoped, tag = 'input window, operand 2, single buffered']
    #allocation8 [shape = 'u8[65536]{0}', space=vmem, size = 0x10000, scoped, tag = 'input window, operand 3, single buffered']
    #allocation9 [shape = 's32[1]{0}', space=sflag, size = 0x4, scoped, tag = 'scoped memory for tpu_custom_call.1']
    #allocation10 [shape = 'u8[1024]{0}', space=vmem, size = 0x400, scoped, tag = 'output window, operand 0, single buffered']
    %10 = vsyncpa [#allocation3], 0
    %11 = vsyncpa [#allocation6], 0
    %12 = vsyncpa [#allocation9], 0
    %13 = vsyncpa [#allocation4], 0
    // Predicated region
    $region2: #{tpu_custom_call.1} parent=1 // pred_check
      _
    $region3: #{tpu_custom_call.1} parent=1 // pred_check_branch
      %15 = sbr.rel (0) target = $region5
    $region4: #{tpu_custom_call.1} parent=1 // pred_region
      %s17 = ssub.s32 4096, 4096
      %18 = vsyncadd [#allocation3], %s17
      %s19 = sshll.u32 [#allocation2], 4
      %s20 = int_to_ptr.vmem [resolvable:$true] %s19
      %25 = dma.hbm_to_vmem [thread:$0]  %s0, 4096, %s20, [#allocation3], 64, 64, 4
    $region5: #{tpu_custom_call.1} parent=1 // pred_fallthru
      _
    // Predicated region
    $region6: #{tpu_custom_call.1} parent=1 // pred_check
      _
    $region7: #{tpu_custom_call.1} parent=1 // pred_check_branch
      %27 = sbr.rel (0) target = $region9
    $region8: #{tpu_custom_call.1} parent=1 // pred_region
      %s29 = ssub.s32 1024, 1024
      %30 = vsyncadd [#allocation6], %s29
      %s31 = sshll.u32 [#allocation5], 4
      %s32 = int_to_ptr.vmem [resolvable:$true] %s31
      %37 = dma.hbm_to_vmem [thread:$0]  %s1, 1024, %s32, [#allocation6], 64, 64, 4
    $region9: #{tpu_custom_call.1} parent=1 // pred_fallthru
      _
    // Predicated region
    $region10: #{tpu_custom_call.1} parent=1 // pred_check
      _
    $region11: #{tpu_custom_call.1} parent=1 // pred_check_branch
      %39 = sbr.rel (0) target = $region13
    $region12: #{tpu_custom_call.1} parent=1 // pred_region
      %s41 = ssub.s32 128, 128
      %42 = vsyncadd [#allocation6], %s41
      %s44 = sshll.u32 [#allocation7], 4
      %s45 = int_to_ptr.vmem [resolvable:$true] %s44
      %47 = dma.hbm_to_vmem [thread:$0]  %s2, 128, %s45, [#allocation6]
    $region13: #{tpu_custom_call.1} parent=1 // pred_fallthru
      _
    // Predicated region
    $region14: #{tpu_custom_call.1} parent=1 // pred_check
      _
    $region15: #{tpu_custom_call.1} parent=1 // pred_check_branch
      %49 = sbr.rel (0) target = $region17
    $region16: #{tpu_custom_call.1} parent=1 // pred_region
      %s51 = ssub.s32 2048, 2048
      %52 = vsyncadd [#allocation9], %s51
      %s53 = sshll.u32 [#allocation8], 4
      %s54 = int_to_ptr.vmem [resolvable:$true] %s53
      %59 = dma.hbm_to_vmem [thread:$0]  %s3, 2048, %s54, [#allocation9], 128, 128, 8
    $region17: #{tpu_custom_call.1} parent=1 // pred_fallthru
      _
    // Predicated region
    $region18: #{tpu_custom_call.1} parent=1 // pred_check
      _
    $region19: #{tpu_custom_call.1} parent=1 // pred_check_branch
      %61 = sbr.rel (0) target = $region21
    $region20: #{tpu_custom_call.1} parent=1 // pred_region
      _
    $region21: #{tpu_custom_call.1} parent=1 // pred_fallthru
      _
    // Predicated region
    $region22: #{tpu_custom_call.1} parent=1 // pred_check
      _
    $region23: #{tpu_custom_call.1} parent=1 // pred_check_branch
      %63 = sbr.rel (0) target = $region25
    $region24: #{tpu_custom_call.1} parent=1 // pred_region
      %64 = dma.done [#allocation3], 4096
    $region25: #{tpu_custom_call.1} parent=1 // pred_fallthru
      _
    // Predicated region
    $region26: #{tpu_custom_call.1} parent=1 // pred_check
      _
    $region27: #{tpu_custom_call.1} parent=1 // pred_check_branch
      %66 = sbr.rel (0) target = $region29
    $region28: #{tpu_custom_call.1} parent=1 // pred_region
      %67 = dma.done [#allocation6], 1024
    $region29: #{tpu_custom_call.1} parent=1 // pred_fallthru
      _
    // Predicated region
    $region30: #{tpu_custom_call.1} parent=1 // pred_check
      _
    $region31: #{tpu_custom_call.1} parent=1 // pred_check_branch
      %69 = sbr.rel (0) target = $region33
    $region32: #{tpu_custom_call.1} parent=1 // pred_region
      %70 = dma.done [#allocation6], 128
    $region33: #{tpu_custom_call.1} parent=1 // pred_fallthru
      _
    // Predicated region
    $region34: #{tpu_custom_call.1} parent=1 // pred_check
      _
    $region35: #{tpu_custom_call.1} parent=1 // pred_check_branch
      %72 = sbr.rel (0) target = $region37
    $region36: #{tpu_custom_call.1} parent=1 // pred_region
      %73 = dma.done [#allocation9], 2048
    $region37: #{tpu_custom_call.1} parent=1 // pred_fallthru
      _
    %v75 = vld [vmem:[#allocation2] sm:$0xf]
    %v76 = vld [vmem:[#allocation2 + $0x4] sm:$0xf]
    %v77 = vld [vmem:[#allocation2 + $0x8] sm:$0xf]
    %v78 = vld [vmem:[#allocation2 + $0xc] sm:$0xf]
    %v79 = vld [vmem:[#allocation2 + $0x10] sm:$0xf]
    %v80 = vld [vmem:[#allocation2 + $0x14] sm:$0xf]
    %v81 = vld [vmem:[#allocation2 + $0x18] sm:$0xf]
    %v82 = vld [vmem:[#allocation2 + $0x1c] sm:$0xf]
    %v83 = vld [vmem:[#allocation2 + $0x20] sm:$0xf]
    %v84 = vld [vmem:[#allocation2 + $0x24] sm:$0xf]
    %v85 = vld [vmem:[#allocation2 + $0x28] sm:$0xf]
    %v86 = vld [vmem:[#allocation2 + $0x2c] sm:$0xf]
    %v87 = vld [vmem:[#allocation2 + $0x30] sm:$0xf]
    %v88 = vld [vmem:[#allocation2 + $0x34] sm:$0xf]
    %v89 = vld [vmem:[#allocation2 + $0x38] sm:$0xf]
    %v90 = vld [vmem:[#allocation2 + $0x3c] sm:$0xf]
    %v91 = vld [vmem:[#allocation2 + $0x40] sm:$0xf]
    %v92 = vld [vmem:[#allocation2 + $0x44] sm:$0xf]
    %v93 = vld [vmem:[#allocation2 + $0x48] sm:$0xf]
    %v94 = vld [vmem:[#allocation2 + $0x4c] sm:$0xf]
    %v95 = vld [vmem:[#allocation2 + $0x50] sm:$0xf]
    %v96 = vld [vmem:[#allocation2 + $0x54] sm:$0xf]
    %v97 = vld [vmem:[#allocation2 + $0x58] sm:$0xf]
    %v98 = vld [vmem:[#allocation2 + $0x5c] sm:$0xf]
    %v99 = vld [vmem:[#allocation2 + $0x60] sm:$0xf]
    %v100 = vld [vmem:[#allocation2 + $0x64] sm:$0xf]
    %v101 = vld [vmem:[#allocation2 + $0x68] sm:$0xf]
    %v102 = vld [vmem:[#allocation2 + $0x6c] sm:$0xf]
    %v103 = vld [vmem:[#allocation2 + $0x70] sm:$0xf]
    %v104 = vld [vmem:[#allocation2 + $0x74] sm:$0xf]
    %v105 = vld [vmem:[#allocation2 + $0x78] sm:$0xf]
    %v106 = vld [vmem:[#allocation2 + $0x7c] sm:$0xf]
    %v107 = vld [vmem:[#allocation2 + $0x80] sm:$0xf]
    %v108 = vld [vmem:[#allocation2 + $0x84] sm:$0xf]
    %v109 = vld [vmem:[#allocation2 + $0x88] sm:$0xf]
    %v110 = vld [vmem:[#allocation2 + $0x8c] sm:$0xf]
    %v111 = vld [vmem:[#allocation2 + $0x90] sm:$0xf]
    %v112 = vld [vmem:[#allocation2 + $0x94] sm:$0xf]
    %v113 = vld [vmem:[#allocation2 + $0x98] sm:$0xf]
    %v114 = vld [vmem:[#allocation2 + $0x9c] sm:$0xf]
    %v115 = vld [vmem:[#allocation2 + $0xa0] sm:$0xf]
    %v116 = vld [vmem:[#allocation2 + $0xa4] sm:$0xf]
    %v117 = vld [vmem:[#allocation2 + $0xa8] sm:$0xf]
    %v118 = vld [vmem:[#allocation2 + $0xac] sm:$0xf]
    %v119 = vld [vmem:[#allocation2 + $0xb0] sm:$0xf]
    %v120 = vld [vmem:[#allocation2 + $0xb4] sm:$0xf]
    %v121 = vld [vmem:[#allocation2 + $0xb8] sm:$0xf]
    %v122 = vld [vmem:[#allocation2 + $0xbc] sm:$0xf]
    %v123 = vld [vmem:[#allocation2 + $0xc0] sm:$0xf]
    %v124 = vld [vmem:[#allocation2 + $0xc4] sm:$0xf]
    %v125 = vld [vmem:[#allocation2 + $0xc8] sm:$0xf]
    %v126 = vld [vmem:[#allocation2 + $0xcc] sm:$0xf]
    %v127 = vld [vmem:[#allocation2 + $0xd0] sm:$0xf]
    %v128 = vld [vmem:[#allocation2 + $0xd4] sm:$0xf]
    %v129 = vld [vmem:[#allocation2 + $0xd8] sm:$0xf]
    %v130 = vld [vmem:[#allocation2 + $0xdc] sm:$0xf]
    %v131 = vld [vmem:[#allocation2 + $0xe0] sm:$0xf]
    %v132 = vld [vmem:[#allocation2 + $0xe4] sm:$0xf]
    %v133 = vld [vmem:[#allocation2 + $0xe8] sm:$0xf]
    %v134 = vld [vmem:[#allocation2 + $0xec] sm:$0xf]
    %v135 = vld [vmem:[#allocation2 + $0xf0] sm:$0xf]
    %v136 = vld [vmem:[#allocation2 + $0xf4] sm:$0xf]
    %v137 = vld [vmem:[#allocation2 + $0xf8] sm:$0xf]
    %v138 = vld [vmem:[#allocation2 + $0xfc] sm:$0xf]
    %v139 = vld [vmem:[#allocation5] sm:$0xf]
    %v140 = vld [vmem:[#allocation5 + $0x4] sm:$0xf]
    %v141 = vld [vmem:[#allocation5 + $0x8] sm:$0xf]
    %v142 = vld [vmem:[#allocation5 + $0xc] sm:$0xf]
    %v143 = vld [vmem:[#allocation5 + $0x10] sm:$0xf]
    %v144 = vld [vmem:[#allocation5 + $0x14] sm:$0xf]
    %v145 = vld [vmem:[#allocation5 + $0x18] sm:$0xf]
    %v146 = vld [vmem:[#allocation5 + $0x1c] sm:$0xf]
    %v147 = vld [vmem:[#allocation5 + $0x20] sm:$0xf]
    %v148 = vld [vmem:[#allocation5 + $0x24] sm:$0xf]
    %v149 = vld [vmem:[#allocation5 + $0x28] sm:$0xf]
    %v150 = vld [vmem:[#allocation5 + $0x2c] sm:$0xf]
    %v151 = vld [vmem:[#allocation5 + $0x30] sm:$0xf]
    %v152 = vld [vmem:[#allocation5 + $0x34] sm:$0xf]
    %v153 = vld [vmem:[#allocation5 + $0x38] sm:$0xf]
    %v154 = vld [vmem:[#allocation5 + $0x3c] sm:$0xf]
    %v219 = vunpack.c.l.b16 %v75
    %v220 = vunpack.c.l.b16 %v76
    %v221 = vunpack.c.l.b16 %v77
    %v222 = vunpack.c.l.b16 %v78
    %v223 = vunpack.c.l.b16 %v79
    %v224 = vunpack.c.l.b16 %v80
    %v225 = vunpack.c.l.b16 %v81
    %v226 = vunpack.c.l.b16 %v82
    %v227 = vunpack.c.l.b16 %v83
    %v228 = vunpack.c.l.b16 %v84
    %v229 = vunpack.c.l.b16 %v85
    %v230 = vunpack.c.l.b16 %v86
    %v231 = vunpack.c.l.b16 %v87
    %v232 = vunpack.c.l.b16 %v88
    %v233 = vunpack.c.l.b16 %v89
    %v234 = vunpack.c.l.b16 %v90
    %v235 = vunpack.c.l.b16 %v91
    %v236 = vunpack.c.l.b16 %v92
    %v237 = vunpack.c.l.b16 %v93
    %v238 = vunpack.c.l.b16 %v94
    %v239 = vunpack.c.l.b16 %v95
    %v240 = vunpack.c.l.b16 %v96
    %v241 = vunpack.c.l.b16 %v97
    %v242 = vunpack.c.l.b16 %v98
    %v243 = vunpack.c.l.b16 %v99
    %v244 = vunpack.c.l.b16 %v100
    %v245 = vunpack.c.l.b16 %v101
    %v246 = vunpack.c.l.b16 %v102
    %v247 = vunpack.c.l.b16 %v103
    %v248 = vunpack.c.l.b16 %v104
    %v249 = vunpack.c.l.b16 %v105
    %v250 = vunpack.c.l.b16 %v106
    %v251 = vunpack.c.l.b16 %v107
    %v252 = vunpack.c.l.b16 %v108
    %v253 = vunpack.c.l.b16 %v109
    %v254 = vunpack.c.l.b16 %v110
    %v255 = vunpack.c.l.b16 %v111
    %v256 = vunpack.c.l.b16 %v112
    %v257 = vunpack.c.l.b16 %v113
    %v258 = vunpack.c.l.b16 %v114
    %v259 = vunpack.c.l.b16 %v115
    %v260 = vunpack.c.l.b16 %v116
    %v261 = vunpack.c.l.b16 %v117
    %v262 = vunpack.c.l.b16 %v118
    %v263 = vunpack.c.l.b16 %v119
    %v264 = vunpack.c.l.b16 %v120
    %v265 = vunpack.c.l.b16 %v121
    %v266 = vunpack.c.l.b16 %v122
    %v267 = vunpack.c.l.b16 %v123
    %v268 = vunpack.c.l.b16 %v124
    %v269 = vunpack.c.l.b16 %v125
    %v270 = vunpack.c.l.b16 %v126
    %v271 = vunpack.c.l.b16 %v127
    %v272 = vunpack.c.l.b16 %v128
    %v273 = vunpack.c.l.b16 %v129
    %v274 = vunpack.c.l.b16 %v130
    %v275 = vunpack.c.l.b16 %v131
    %v276 = vunpack.c.l.b16 %v132
    %v277 = vunpack.c.l.b16 %v133
    %v278 = vunpack.c.l.b16 %v134
    %v279 = vunpack.c.l.b16 %v135
    %v280 = vunpack.c.l.b16 %v136
    %v281 = vunpack.c.l.b16 %v137
    %v282 = vunpack.c.l.b16 %v138
    %v283 = vpack.c.b16 %v220, %v219
    %v284 = vpack.c.b16 %v222, %v221
    %v285 = vpack.c.b16 %v224, %v223
    %v286 = vpack.c.b16 %v226, %v225
    %v287 = vpack.c.b16 %v228, %v227
    %v288 = vpack.c.b16 %v230, %v229
    %v289 = vpack.c.b16 %v232, %v231
    %v290 = vpack.c.b16 %v234, %v233
    %v291 = vpack.c.b16 %v236, %v235
    %v292 = vpack.c.b16 %v238, %v237
    %v293 = vpack.c.b16 %v240, %v239
    %v294 = vpack.c.b16 %v242, %v241
    %v295 = vpack.c.b16 %v244, %v243
    %v296 = vpack.c.b16 %v246, %v245
    %v297 = vpack.c.b16 %v248, %v247
    %v298 = vpack.c.b16 %v250, %v249
    %v299 = vpack.c.b16 %v252, %v251
    %v300 = vpack.c.b16 %v254, %v253
    %v301 = vpack.c.b16 %v256, %v255
    %v302 = vpack.c.b16 %v258, %v257
    %v303 = vpack.c.b16 %v260, %v259
    %v304 = vpack.c.b16 %v262, %v261
    %v305 = vpack.c.b16 %v264, %v263
    %v306 = vpack.c.b16 %v266, %v265
    %v307 = vpack.c.b16 %v268, %v267
    %v308 = vpack.c.b16 %v270, %v269
    %v309 = vpack.c.b16 %v272, %v271
    %v310 = vpack.c.b16 %v274, %v273
    %v311 = vpack.c.b16 %v276, %v275
    %v312 = vpack.c.b16 %v278, %v277
    %v313 = vpack.c.b16 %v280, %v279
    %v314 = vpack.c.b16 %v282, %v281
    %v363 = vunpack.c.l.b16 %v139
    %v364 = vunpack.c.l.b16 %v140
    %v365 = vunpack.c.l.b16 %v141
    %v366 = vunpack.c.l.b16 %v142
    %v367 = vunpack.c.l.b16 %v143
    %v368 = vunpack.c.l.b16 %v144
    %v369 = vunpack.c.l.b16 %v145
    %v370 = vunpack.c.l.b16 %v146
    %v371 = vunpack.c.l.b16 %v147
    %v372 = vunpack.c.l.b16 %v148
    %v373 = vunpack.c.l.b16 %v149
    %v374 = vunpack.c.l.b16 %v150
    %v375 = vunpack.c.l.b16 %v151
    %v376 = vunpack.c.l.b16 %v152
    %v377 = vunpack.c.l.b16 %v153
    %v378 = vunpack.c.l.b16 %v154
    %v379 = vpack.c.b16 %v364, %v363
    %v380 = vpack.c.b16 %v366, %v365
    %v381 = vpack.c.b16 %v368, %v367
    %v382 = vpack.c.b16 %v370, %v369
    %v383 = vpack.c.b16 %v372, %v371
    %v384 = vpack.c.b16 %v374, %v373
    %v385 = vpack.c.b16 %v376, %v375
    %v386 = vpack.c.b16 %v378, %v377
    %395 = vmatprep.subr.bf16.mxu0 0
    %396 = vmatpush1.bf16.msra.mxu0 %v379
    %397 = vmatprep.subr.bf16.mxu0 0
    %398 = vmatpush1.bf16.msra.mxu0 %v380
    %399 = vmatprep.subr.bf16.mxu0 0
    %400 = vmatpush1.bf16.msra.mxu0 %v381
    %401 = vmatprep.subr.bf16.mxu0 0
    %402 = vmatpush1.bf16.msra.mxu0 %v382
    %403 = vmatprep.subr.bf16.mxu0 0
    %404 = vmatpush1.bf16.msra.mxu0 %v383
    %405 = vmatprep.subr.bf16.mxu0 0
    %406 = vmatpush1.bf16.msra.mxu0 %v384
    %407 = vmatprep.subr.bf16.mxu0 0
    %408 = vmatpush1.bf16.msra.mxu0 %v385
    %409 = vmatprep.subr.bf16.mxu0 0
    %410 = vmatpush1.bf16.msra.mxu0 %v386
    %411 = vmatprep.subr.bf16.mxu0 0
    %412 = vmatpush1.bf16.msra.mxu0 0
    %413 = vmatprep.subr.bf16.mxu0 0
    %414 = vmatpush1.bf16.msra.mxu0 0
    %415 = vmatprep.subr.bf16.mxu0 0
    %416 = vmatpush1.bf16.msra.mxu0 0
    %417 = vmatprep.subr.bf16.mxu0 0
    %418 = vmatpush1.bf16.msra.mxu0 0
    %419 = vmatprep.subr.bf16.mxu0 0
    %420 = vmatpush1.bf16.msra.mxu0 0
    %421 = vmatprep.subr.bf16.mxu0 0
    %422 = vmatpush1.bf16.msra.mxu0 0
    %423 = vmatprep.subr.bf16.mxu0 0
    %424 = vmatpush1.bf16.msra.mxu0 0
    %425 = vmatprep.subr.bf16.mxu0 0
    %426 = vmatpush1.bf16.msra.mxu0 0
    %427 = vmatprep.mubr.bf16.mxu0 0
    %428 = vmatmul.mubr.bf16.gmra.mrb[0].mxu0 %v283
    %v429 = vpop.f32.mrb[0].mxu0
    %v430 = vadd.f32 0.0, %v429
    %v431 = vpop.f32.mrb[0].mxu0
    %v432 = vpop.f32.mrb[0].mxu0
    %v433 = vadd.f32 0.0, %v432
    %v434 = vpop.f32.mrb[0].mxu0
    %435 = vmatprep.mubr.bf16.mxu0 0
    %436 = vmatmul.mubr.bf16.gmra.mrb[0].mxu0 %v284
    %v437 = vpop.f32.mrb[0].mxu0
    %v438 = vadd.f32 0.0, %v437
    %v439 = vpop.f32.mrb[0].mxu0
    %v440 = vpop.f32.mrb[0].mxu0
    %v441 = vadd.f32 0.0, %v440
    %v442 = vpop.f32.mrb[0].mxu0
    %443 = vmatprep.mubr.bf16.mxu0 0
    %444 = vmatmul.mubr.bf16.gmra.mrb[0].mxu0 %v285
    %v445 = vpop.f32.mrb[0].mxu0
    %v446 = vadd.f32 0.0, %v445
    %v447 = vpop.f32.mrb[0].mxu0
    %v448 = vpop.f32.mrb[0].mxu0
    %v449 = vadd.f32 0.0, %v448
    %v450 = vpop.f32.mrb[0].mxu0
    %451 = vmatprep.mubr.bf16.mxu0 0
    %452 = vmatmul.mubr.bf16.gmra.mrb[0].mxu0 %v286
    %v453 = vpop.f32.mrb[0].mxu0
    %v454 = vadd.f32 0.0, %v453
    %v455 = vpop.f32.mrb[0].mxu0
    %v456 = vpop.f32.mrb[0].mxu0
    %v457 = vadd.f32 0.0, %v456
    %v458 = vpop.f32.mrb[0].mxu0
    %459 = vmatprep.mubr.bf16.mxu0 0
    %460 = vmatmul.mubr.bf16.gmra.mrb[0].mxu0 %v287
    %v461 = vpop.f32.mrb[0].mxu0
    %v462 = vadd.f32 0.0, %v461
    %v463 = vpop.f32.mrb[0].mxu0
    %v464 = vpop.f32.mrb[0].mxu0
    %v465 = vadd.f32 0.0, %v464
    %v466 = vpop.f32.mrb[0].mxu0
    %467 = vmatprep.mubr.bf16.mxu0 0
    %468 = vmatmul.mubr.bf16.gmra.mrb[0].mxu0 %v288
    %v469 = vpop.f32.mrb[0].mxu0
    %v470 = vadd.f32 0.0, %v469
    %v471 = vpop.f32.mrb[0].mxu0
    %v472 = vpop.f32.mrb[0].mxu0
    %v473 = vadd.f32 0.0, %v472
    %v474 = vpop.f32.mrb[0].mxu0
    %475 = vmatprep.mubr.bf16.mxu0 0
    %476 = vmatmul.mubr.bf16.gmra.mrb[0].mxu0 %v289
    %v477 = vpop.f32.mrb[0].mxu0
    %v478 = vadd.f32 0.0, %v477
    %v479 = vpop.f32.mrb[0].mxu0
    %v480 = vpop.f32.mrb[0].mxu0
    %v481 = vadd.f32 0.0, %v480
    %v482 = vpop.f32.mrb[0].mxu0
    %483 = vmatprep.mubr.bf16.mxu0 0
    %484 = vmatmul.mubr.bf16.gmra.mrb[0].mxu0 %v290
    %v485 = vpop.f32.mrb[0].mxu0
    %v486 = vadd.f32 0.0, %v485
    %v487 = vpop.f32.mrb[0].mxu0
    %v488 = vpop.f32.mrb[0].mxu0
    %v489 = vadd.f32 0.0, %v488
    %v490 = vpop.f32.mrb[0].mxu0
    %491 = vmatprep.mubr.bf16.mxu0 0
    %492 = vmatmul.mubr.bf16.gmra.mrb[0].mxu0 %v291
    %v493 = vpop.f32.mrb[0].mxu0
    %v494 = vadd.f32 0.0, %v493
    %v495 = vpop.f32.mrb[0].mxu0
    %v496 = vpop.f32.mrb[0].mxu0
    %v497 = vadd.f32 0.0, %v496
    %v498 = vpop.f32.mrb[0].mxu0
    %499 = vmatprep.mubr.bf16.mxu0 0
    %500 = vmatmul.mubr.bf16.gmra.mrb[0].mxu0 %v292
    %v501 = vpop.f32.mrb[0].mxu0
    %v502 = vadd.f32 0.0, %v501
    %v503 = vpop.f32.mrb[0].mxu0
    %v504 = vpop.f32.mrb[0].mxu0
    %v505 = vadd.f32 0.0, %v504
    %v506 = vpop.f32.mrb[0].mxu0
    %507 = vmatprep.mubr.bf16.mxu0 0
    %508 = vmatmul.mubr.bf16.gmra.mrb[0].mxu0 %v293
    %v509 = vpop.f32.mrb[0].mxu0
    %v510 = vadd.f32 0.0, %v509
    %v511 = vpop.f32.mrb[0].mxu0
    %v512 = vpop.f32.mrb[0].mxu0
    %v513 = vadd.f32 0.0, %v512
    %v514 = vpop.f32.mrb[0].mxu0
    %515 = vmatprep.mubr.bf16.mxu0 0
    %516 = vmatmul.mubr.bf16.gmra.mrb[0].mxu0 %v294
    %v517 = vpop.f32.mrb[0].mxu0
    %v518 = vadd.f32 0.0, %v517
    %v519 = vpop.f32.mrb[0].mxu0
    %v520 = vpop.f32.mrb[0].mxu0
    %v521 = vadd.f32 0.0, %v520
    %v522 = vpop.f32.mrb[0].mxu0
    %523 = vmatprep.mubr.bf16.mxu0 0
    %524 = vmatmul.mubr.bf16.gmra.mrb[0].mxu0 %v295
    %v525 = vpop.f32.mrb[0].mxu0
    %v526 = vadd.f32 0.0, %v525
    %v527 = vpop.f32.mrb[0].mxu0
    %v528 = vpop.f32.mrb[0].mxu0
    %v529 = vadd.f32 0.0, %v528
    %v530 = vpop.f32.mrb[0].mxu0
    %531 = vmatprep.mubr.bf16.mxu0 0
    %532 = vmatmul.mubr.bf16.gmra.mrb[0].mxu0 %v296
    %v533 = vpop.f32.mrb[0].mxu0
    %v534 = vadd.f32 0.0, %v533
    %v535 = vpop.f32.mrb[0].mxu0
    %v536 = vpop.f32.mrb[0].mxu0
    %v537 = vadd.f32 0.0, %v536
    %v538 = vpop.f32.mrb[0].mxu0
    %539 = vmatprep.mubr.bf16.mxu0 0
    %540 = vmatmul.mubr.bf16.gmra.mrb[0].mxu0 %v297
    %v541 = vpop.f32.mrb[0].mxu0
    %v542 = vadd.f32 0.0, %v541
    %v543 = vpop.f32.mrb[0].mxu0
    %v544 = vpop.f32.mrb[0].mxu0
    %v545 = vadd.f32 0.0, %v544
    %v546 = vpop.f32.mrb[0].mxu0
    %547 = vmatprep.mubr.bf16.mxu0 0
    %548 = vmatmul.mubr.bf16.gmra.mrb[0].mxu0 %v298
    %v549 = vpop.f32.mrb[0].mxu0
    %v550 = vadd.f32 0.0, %v549
    %v551 = vpop.f32.mrb[0].mxu0
    %v552 = vpop.f32.mrb[0].mxu0
    %v553 = vadd.f32 0.0, %v552
    %v554 = vpop.f32.mrb[0].mxu0
    %555 = vmatprep.mubr.bf16.mxu0 0
    %556 = vmatmul.mubr.bf16.gmra.mrb[0].mxu0 %v299
    %v557 = vpop.f32.mrb[0].mxu0
    %v558 = vadd.f32 0.0, %v557
    %v559 = vpop.f32.mrb[0].mxu0
    %v560 = vpop.f32.mrb[0].mxu0
    %v561 = vadd.f32 0.0, %v560
    %v562 = vpop.f32.mrb[0].mxu0
    %563 = vmatprep.mubr.bf16.mxu0 0
    %564 = vmatmul.mubr.bf16.gmra.mrb[0].mxu0 %v300
    %v565 = vpop.f32.mrb[0].mxu0
    %v566 = vadd.f32 0.0, %v565
    %v567 = vpop.f32.mrb[0].mxu0
    %v568 = vpop.f32.mrb[0].mxu0
    %v569 = vadd.f32 0.0, %v568
    %v570 = vpop.f32.mrb[0].mxu0
    %571 = vmatprep.mubr.bf16.mxu0 0
    %572 = vmatmul.mubr.bf16.gmra.mrb[0].mxu0 %v301
    %v573 = vpop.f32.mrb[0].mxu0
    %v574 = vadd.f32 0.0, %v573
    %v575 = vpop.f32.mrb[0].mxu0
    %v576 = vpop.f32.mrb[0].mxu0
    %v577 = vadd.f32 0.0, %v576
    %v578 = vpop.f32.mrb[0].mxu0
    %579 = vmatprep.mubr.bf16.mxu0 0
    %580 = vmatmul.mubr.bf16.gmra.mrb[0].mxu0 %v302
    %v581 = vpop.f32.mrb[0].mxu0
    %v582 = vadd.f32 0.0, %v581
    %v583 = vpop.f32.mrb[0].mxu0
    %v584 = vpop.f32.mrb[0].mxu0
    %v585 = vadd.f32 0.0, %v584
    %v586 = vpop.f32.mrb[0].mxu0
    %587 = vmatprep.mubr.bf16.mxu0 0
    %588 = vmatmul.mubr.bf16.gmra.mrb[0].mxu0 %v303
    %v589 = vpop.f32.mrb[0].mxu0
    %v590 = vadd.f32 0.0, %v589
    %v591 = vpop.f32.mrb[0].mxu0
    %v592 = vpop.f32.mrb[0].mxu0
    %v593 = vadd.f32 0.0, %v592
    %v594 = vpop.f32.mrb[0].mxu0
    %595 = vmatprep.mubr.bf16.mxu0 0
    %596 = vmatmul.mubr.bf16.gmra.mrb[0].mxu0 %v304
    %v597 = vpop.f32.mrb[0].mxu0
    %v598 = vadd.f32 0.0, %v597
    %v599 = vpop.f32.mrb[0].mxu0
    %v600 = vpop.f32.mrb[0].mxu0
    %v601 = vadd.f32 0.0, %v600
    %v602 = vpop.f32.mrb[0].mxu0
    %603 = vmatprep.mubr.bf16.mxu0 0
    %604 = vmatmul.mubr.bf16.gmra.mrb[0].mxu0 %v305
    %v605 = vpop.f32.mrb[0].mxu0
    %v606 = vadd.f32 0.0, %v605
    %v607 = vpop.f32.mrb[0].mxu0
    %v608 = vpop.f32.mrb[0].mxu0
    %v609 = vadd.f32 0.0, %v608
    %v610 = vpop.f32.mrb[0].mxu0
    %611 = vmatprep.mubr.bf16.mxu0 0
    %612 = vmatmul.mubr.bf16.gmra.mrb[0].mxu0 %v306
    %v613 = vpop.f32.mrb[0].mxu0
    %v614 = vadd.f32 0.0, %v613
    %v615 = vpop.f32.mrb[0].mxu0
    %v616 = vpop.f32.mrb[0].mxu0
    %v617 = vadd.f32 0.0, %v616
    %v618 = vpop.f32.mrb[0].mxu0
    %619 = vmatprep.mubr.bf16.mxu0 0
    %620 = vmatmul.mubr.bf16.gmra.mrb[0].mxu0 %v307
    %v621 = vpop.f32.mrb[0].mxu0
    %v622 = vadd.f32 0.0, %v621
    %v623 = vpop.f32.mrb[0].mxu0
    %v624 = vpop.f32.mrb[0].mxu0
    %v625 = vadd.f32 0.0, %v624
    %v626 = vpop.f32.mrb[0].mxu0
    %627 = vmatprep.mubr.bf16.mxu0 0
    %628 = vmatmul.mubr.bf16.gmra.mrb[0].mxu0 %v308
    %v629 = vpop.f32.mrb[0].mxu0
    %v630 = vadd.f32 0.0, %v629
    %v631 = vpop.f32.mrb[0].mxu0
    %v632 = vpop.f32.mrb[0].mxu0
    %v633 = vadd.f32 0.0, %v632
    %v634 = vpop.f32.mrb[0].mxu0
    %635 = vmatprep.mubr.bf16.mxu0 0
    %636 = vmatmul.mubr.bf16.gmra.mrb[0].mxu0 %v309
    %v637 = vpop.f32.mrb[0].mxu0
    %v638 = vadd.f32 0.0, %v637
    %v639 = vpop.f32.mrb[0].mxu0
    %v640 = vpop.f32.mrb[0].mxu0
    %v641 = vadd.f32 0.0, %v640
    %v642 = vpop.f32.mrb[0].mxu0
    %643 = vmatprep.mubr.bf16.mxu0 0
    %644 = vmatmul.mubr.bf16.gmra.mrb[0].mxu0 %v310
    %v645 = vpop.f32.mrb[0].mxu0
    %v646 = vadd.f32 0.0, %v645
    %v647 = vpop.f32.mrb[0].mxu0
    %v648 = vpop.f32.mrb[0].mxu0
    %v649 = vadd.f32 0.0, %v648
    %v650 = vpop.f32.mrb[0].mxu0
    %651 = vmatprep.mubr.bf16.mxu0 0
    %652 = vmatmul.mubr.bf16.gmra.mrb[0].mxu0 %v311
    %v653 = vpop.f32.mrb[0].mxu0
    %v654 = vadd.f32 0.0, %v653
    %v655 = vpop.f32.mrb[0].mxu0
    %v656 = vpop.f32.mrb[0].mxu0
    %v657 = vadd.f32 0.0, %v656
    %v658 = vpop.f32.mrb[0].mxu0
    %659 = vmatprep.mubr.bf16.mxu0 0
    %660 = vmatmul.mubr.bf16.gmra.mrb[0].mxu0 %v312
    %v661 = vpop.f32.mrb[0].mxu0
    %v662 = vadd.f32 0.0, %v661
    %v663 = vpop.f32.mrb[0].mxu0
    %v664 = vpop.f32.mrb[0].mxu0
    %v665 = vadd.f32 0.0, %v664
    %v666 = vpop.f32.mrb[0].mxu0
    %667 = vmatprep.mubr.bf16.mxu0 0
    %668 = vmatmul.mubr.bf16.gmra.mrb[0].mxu0 %v313
    %v669 = vpop.f32.mrb[0].mxu0
    %v670 = vadd.f32 0.0, %v669
    %v671 = vpop.f32.mrb[0].mxu0
    %v672 = vpop.f32.mrb[0].mxu0
    %v673 = vadd.f32 0.0, %v672
    %v674 = vpop.f32.mrb[0].mxu0
    %675 = vmatprep.mubr.bf16.mxu0 0
    %676 = vmatmul.mubr.bf16.gmra.mrb[0].mxu0 %v314
    %v677 = vpop.f32.mrb[0].mxu0
    %v678 = vadd.f32 0.0, %v677
    %v679 = vpop.f32.mrb[0].mxu0
    %v680 = vpop.f32.mrb[0].mxu0
    %v681 = vadd.f32 0.0, %v680
    %v682 = vpop.f32.mrb[0].mxu0
    %683 = vdwg.mxu0
    %v684 = vmax.f32 %v430, 0.0
    %v685 = vmax.f32 %v433, 0.0
    %v686 = vmax.f32 %v438, 0.0
    %v687 = vmax.f32 %v441, 0.0
    %v688 = vmax.f32 %v446, 0.0
    %v689 = vmax.f32 %v449, 0.0
    %v690 = vmax.f32 %v454, 0.0
    %v691 = vmax.f32 %v457, 0.0
    %v692 = vmax.f32 %v462, 0.0
    %v693 = vmax.f32 %v465, 0.0
    %v694 = vmax.f32 %v470, 0.0
    %v695 = vmax.f32 %v473, 0.0
    %v696 = vmax.f32 %v478, 0.0
    %v697 = vmax.f32 %v481, 0.0
    %v698 = vmax.f32 %v486, 0.0
    %v699 = vmax.f32 %v489, 0.0
    %v700 = vmax.f32 %v494, 0.0
    %v701 = vmax.f32 %v497, 0.0
    %v702 = vmax.f32 %v502, 0.0
    %v703 = vmax.f32 %v505, 0.0
    %v704 = vmax.f32 %v510, 0.0
    %v705 = vmax.f32 %v513, 0.0
    %v706 = vmax.f32 %v518, 0.0
    %v707 = vmax.f32 %v521, 0.0
    %v708 = vmax.f32 %v526, 0.0
    %v709 = vmax.f32 %v529, 0.0
    %v710 = vmax.f32 %v534, 0.0
    %v711 = vmax.f32 %v537, 0.0
    %v712 = vmax.f32 %v542, 0.0
    %v713 = vmax.f32 %v545, 0.0
    %v714 = vmax.f32 %v550, 0.0
    %v715 = vmax.f32 %v553, 0.0
    %v716 = vmax.f32 %v558, 0.0
    %v717 = vmax.f32 %v561, 0.0
    %v718 = vmax.f32 %v566, 0.0
    %v719 = vmax.f32 %v569, 0.0
    %v720 = vmax.f32 %v574, 0.0
    %v721 = vmax.f32 %v577, 0.0
    %v722 = vmax.f32 %v582, 0.0
    %v723 = vmax.f32 %v585, 0.0
    %v724 = vmax.f32 %v590, 0.0
    %v725 = vmax.f32 %v593, 0.0
    %v726 = vmax.f32 %v598, 0.0
    %v727 = vmax.f32 %v601, 0.0
    %v728 = vmax.f32 %v606, 0.0
    %v729 = vmax.f32 %v609, 0.0
    %v730 = vmax.f32 %v614, 0.0
    %v731 = vmax.f32 %v617, 0.0
    %v732 = vmax.f32 %v622, 0.0
    %v733 = vmax.f32 %v625, 0.0
    %v734 = vmax.f32 %v630, 0.0
    %v735 = vmax.f32 %v633, 0.0
    %v736 = vmax.f32 %v638, 0.0
    %v737 = vmax.f32 %v641, 0.0
    %v738 = vmax.f32 %v646, 0.0
    %v739 = vmax.f32 %v649, 0.0
    %v740 = vmax.f32 %v654, 0.0
    %v741 = vmax.f32 %v657, 0.0
    %v742 = vmax.f32 %v662, 0.0
    %v743 = vmax.f32 %v665, 0.0
    %v744 = vmax.f32 %v670, 0.0
    %v745 = vmax.f32 %v673, 0.0
    %v746 = vmax.f32 %v678, 0.0
    %v747 = vmax.f32 %v681, 0.0
    %v748 = vld [vmem:[#allocation7] sm:$0xff]
    %v750 = vcombine.high %v748, %v748
    %v752 = vunpack.c.l.s4 1983009808
    %v753 = vunpack.c.0.s8 %v752
    %v754 = vlaneseq
    %v755 = vshrl.u32 %v754, 7
    %v756 = vsub.s32 %v753, %v755
    %v757 = vrot.slane %v748, %v756
    %v759 = vunpack.c.l.s4 1983009808
    %v760 = vunpack.c.0.s8 %v759
    %v761 = vlaneseq
    %v762 = vshrl.u32 %v761, 7
    %v763 = vsub.s32 %v760, %v762
    %v764 = vrot.slane %v750, %v763
    %v765 = vcombine.high %v757, %v757
    %v766 = vcombine.high %v764, %v764
    %771 = vmatprep.subr.mxu0 0.0
    %772 = vmatpush1.msra.mxu0 %v684
    %773 = vmatprep.subr.mxu0 0.0
    %774 = vmatpush1.msra.mxu0 %v685
    %775 = vmatprep.subr.mxu0 0.0
    %776 = vmatpush1.msra.mxu0 %v686
    %777 = vmatprep.subr.mxu0 0.0
    %778 = vmatpush1.msra.mxu0 %v687
    %779 = vmatprep.subr.mxu0 0.0
    %780 = vmatpush1.msra.mxu0 %v688
    %781 = vmatprep.subr.mxu0 0.0
    %782 = vmatpush1.msra.mxu0 %v689
    %783 = vmatprep.subr.mxu0 0.0
    %784 = vmatpush1.msra.mxu0 %v690
    %785 = vmatprep.subr.mxu0 0.0
    %786 = vmatpush1.msra.mxu0 %v691
    %787 = vmatprep.subr.mxu0 0.0
    %788 = vmatpush1.msra.mxu0 %v692
    %789 = vmatprep.subr.mxu0 0.0
    %790 = vmatpush1.msra.mxu0 %v693
    %791 = vmatprep.subr.mxu0 0.0
    %792 = vmatpush1.msra.mxu0 %v694
    %793 = vmatprep.subr.mxu0 0.0
    %794 = vmatpush1.msra.mxu0 %v695
    %795 = vmatprep.subr.mxu0 0.0
    %796 = vmatpush1.msra.mxu0 %v696
    %797 = vmatprep.subr.mxu0 0.0
    %798 = vmatpush1.msra.mxu0 %v697
    %799 = vmatprep.subr.mxu0 0.0
    %800 = vmatpush1.msra.mxu0 %v698
    %801 = vmatprep.subr.mxu0 0.0
    %802 = vmatpush1.msra.mxu0 %v699
    %803 = vmatprep.subr.mxu0 0.0
    %804 = vmatpush1.msra.mxu0 %v700
    %805 = vmatprep.subr.mxu0 0.0
    %806 = vmatpush1.msra.mxu0 %v701
    %807 = vmatprep.subr.mxu0 0.0
    %808 = vmatpush1.msra.mxu0 %v702
    %809 = vmatprep.subr.mxu0 0.0
    %810 = vmatpush1.msra.mxu0 %v703
    %811 = vmatprep.subr.mxu0 0.0
    %812 = vmatpush1.msra.mxu0 %v704
    %813 = vmatprep.subr.mxu0 0.0
    %814 = vmatpush1.msra.mxu0 %v705
    %815 = vmatprep.subr.mxu0 0.0
    %816 = vmatpush1.msra.mxu0 %v706
    %817 = vmatprep.subr.mxu0 0.0
    %818 = vmatpush1.msra.mxu0 %v707
    %819 = vmatprep.subr.mxu0 0.0
    %820 = vmatpush1.msra.mxu0 %v708
    %821 = vmatprep.subr.mxu0 0.0
    %822 = vmatpush1.msra.mxu0 %v709
    %823 = vmatprep.subr.mxu0 0.0
    %824 = vmatpush1.msra.mxu0 %v710
    %825 = vmatprep.subr.mxu0 0.0
    %826 = vmatpush1.msra.mxu0 %v711
    %827 = vmatprep.subr.mxu0 0.0
    %828 = vmatpush1.msra.mxu0 %v712
    %829 = vmatprep.subr.mxu0 0.0
    %830 = vmatpush1.msra.mxu0 %v713
    %831 = vmatprep.subr.mxu0 0.0
    %832 = vmatpush1.msra.mxu0 %v714
    %833 = vmatprep.subr.mxu0 0.0
    %834 = vmatpush1.msra.mxu0 %v715
    %835 = vmatprep.mubr.f32.mxu0 %v765
    %836 = vmatmul.mubr.f32.gmra.mrb[0].mxu0 %v757
    %v837 = vpop.f32.mrb[0].mxu0
    %v838 = vadd.f32 0.0, %v837
    %v839 = vpop.f32.mrb[0].mxu0
    %840 = vdwg.mxu0
    %841 = vmatprep.subr.mxu0 0.0
    %842 = vmatpush1.msra.mxu0 %v716
    %843 = vmatprep.subr.mxu0 0.0
    %844 = vmatpush1.msra.mxu0 %v717
    %845 = vmatprep.subr.mxu0 0.0
    %846 = vmatpush1.msra.mxu0 %v718
    %847 = vmatprep.subr.mxu0 0.0
    %848 = vmatpush1.msra.mxu0 %v719
    %849 = vmatprep.subr.mxu0 0.0
    %850 = vmatpush1.msra.mxu0 %v720
    %851 = vmatprep.subr.mxu0 0.0
    %852 = vmatpush1.msra.mxu0 %v721
    %853 = vmatprep.subr.mxu0 0.0
    %854 = vmatpush1.msra.mxu0 %v722
    %855 = vmatprep.subr.mxu0 0.0
    %856 = vmatpush1.msra.mxu0 %v723
    %857 = vmatprep.subr.mxu0 0.0
    %858 = vmatpush1.msra.mxu0 %v724
    %859 = vmatprep.subr.mxu0 0.0
    %860 = vmatpush1.msra.mxu0 %v725
    %861 = vmatprep.subr.mxu0 0.0
    %862 = vmatpush1.msra.mxu0 %v726
    %863 = vmatprep.subr.mxu0 0.0
    %864 = vmatpush1.msra.mxu0 %v727
    %865 = vmatprep.subr.mxu0 0.0
    %866 = vmatpush1.msra.mxu0 %v728
    %867 = vmatprep.subr.mxu0 0.0
    %868 = vmatpush1.msra.mxu0 %v729
    %869 = vmatprep.subr.mxu0 0.0
    %870 = vmatpush1.msra.mxu0 %v730
    %871 = vmatprep.subr.mxu0 0.0
    %872 = vmatpush1.msra.mxu0 %v731
    %873 = vmatprep.subr.mxu0 0.0
    %874 = vmatpush1.msra.mxu0 %v732
    %875 = vmatprep.subr.mxu0 0.0
    %876 = vmatpush1.msra.mxu0 %v733
    %877 = vmatprep.subr.mxu0 0.0
    %878 = vmatpush1.msra.mxu0 %v734
    %879 = vmatprep.subr.mxu0 0.0
    %880 = vmatpush1.msra.mxu0 %v735
    %881 = vmatprep.subr.mxu0 0.0
    %882 = vmatpush1.msra.mxu0 %v736
    %883 = vmatprep.subr.mxu0 0.0
    %884 = vmatpush1.msra.mxu0 %v737
    %885 = vmatprep.subr.mxu0 0.0
    %886 = vmatpush1.msra.mxu0 %v738
    %887 = vmatprep.subr.mxu0 0.0
    %888 = vmatpush1.msra.mxu0 %v739
    %889 = vmatprep.subr.mxu0 0.0
    %890 = vmatpush1.msra.mxu0 %v740
    %891 = vmatprep.subr.mxu0 0.0
    %892 = vmatpush1.msra.mxu0 %v741
    %893 = vmatprep.subr.mxu0 0.0
    %894 = vmatpush1.msra.mxu0 %v742
    %895 = vmatprep.subr.mxu0 0.0
    %896 = vmatpush1.msra.mxu0 %v743
    %897 = vmatprep.subr.mxu0 0.0
    %898 = vmatpush1.msra.mxu0 %v744
    %899 = vmatprep.subr.mxu0 0.0
    %900 = vmatpush1.msra.mxu0 %v745
    %901 = vmatprep.subr.mxu0 0.0
    %902 = vmatpush1.msra.mxu0 %v746
    %903 = vmatprep.subr.mxu0 0.0
    %904 = vmatpush1.msra.mxu0 %v747
    %905 = vmatprep.mubr.f32.mxu0 %v766
    %906 = vmatmul.mubr.f32.gmra.mrb[0].mxu0 %v764
    %v907 = vpop.f32.mrb[0].mxu0
    %v908 = vadd.f32 %v838, %v907
    %v909 = vpop.f32.mrb[0].mxu0
    %910 = vdwg.mxu0
    %v911 = vld [vmem:[#allocation8] sm:$0xff]
    %v912 = vld [vmem:[#allocation8 + $0x8] sm:$0xff]
    %v913 = vld [vmem:[#allocation8 + $0x10] sm:$0xff]
    %v914 = vld [vmem:[#allocation8 + $0x18] sm:$0xff]
    %v915 = vld [vmem:[#allocation8 + $0x20] sm:$0xff]
    %v916 = vld [vmem:[#allocation8 + $0x28] sm:$0xff]
    %v917 = vld [vmem:[#allocation8 + $0x30] sm:$0xff]
    %v918 = vld [vmem:[#allocation8 + $0x38] sm:$0xff]
    %v919 = vld [vmem:[#allocation8 + $0x40] sm:$0xff]
    %v920 = vld [vmem:[#allocation8 + $0x48] sm:$0xff]
    %v921 = vld [vmem:[#allocation8 + $0x50] sm:$0xff]
    %v922 = vld [vmem:[#allocation8 + $0x58] sm:$0xff]
    %v923 = vld [vmem:[#allocation8 + $0x60] sm:$0xff]
    %v924 = vld [vmem:[#allocation8 + $0x68] sm:$0xff]
    %v925 = vld [vmem:[#allocation8 + $0x70] sm:$0xff]
    %v926 = vld [vmem:[#allocation8 + $0x78] sm:$0xff]
    %v927 = vld [vmem:[%s4] sm:$0x1]
    %v929 = vlaneseq
    %v930 = vshrl.u32 %v929, 7
    %v931 = vsub.s32 0, %v930
    %v932 = vrot.slane %v927, %v931
    %934 = vmatprep.subr.mxu0 0.0
    %935 = vmatpush1.msra.mxu0 %v911
    %936 = vmatprep.subr.mxu0 0.0
    %937 = vmatpush1.msra.mxu0 %v912
    %938 = vmatprep.subr.mxu0 0.0
    %939 = vmatpush1.msra.mxu0 %v913
    %940 = vmatprep.subr.mxu0 0.0
    %941 = vmatpush1.msra.mxu0 %v914
    %942 = vmatprep.subr.mxu0 0.0
    %943 = vmatpush1.msra.mxu0 %v915
    %944 = vmatprep.subr.mxu0 0.0
    %945 = vmatpush1.msra.mxu0 %v916
    %946 = vmatprep.subr.mxu0 0.0
    %947 = vmatpush1.msra.mxu0 %v917
    %948 = vmatprep.subr.mxu0 0.0
    %949 = vmatpush1.msra.mxu0 %v918
    %950 = vmatprep.subr.mxu0 0.0
    %951 = vmatpush1.msra.mxu0 %v919
    %952 = vmatprep.subr.mxu0 0.0
    %953 = vmatpush1.msra.mxu0 %v920
    %954 = vmatprep.subr.mxu0 0.0
    %955 = vmatpush1.msra.mxu0 %v921
    %956 = vmatprep.subr.mxu0 0.0
    %957 = vmatpush1.msra.mxu0 %v922
    %958 = vmatprep.subr.mxu0 0.0
    %959 = vmatpush1.msra.mxu0 %v923
    %960 = vmatprep.subr.mxu0 0.0
    %961 = vmatpush1.msra.mxu0 %v924
    %962 = vmatprep.subr.mxu0 0.0
    %963 = vmatpush1.msra.mxu0 %v925
    %964 = vmatprep.subr.mxu0 0.0
    %965 = vmatpush1.msra.mxu0 %v926
    %966 = vmatprep.subr.mxu0 0.0
    %967 = vmatpush1.msra.mxu0 0.0
    %968 = vmatprep.subr.mxu0 0.0
    %969 = vmatpush1.msra.mxu0 0.0
    %970 = vmatprep.subr.mxu0 0.0
    %971 = vmatpush1.msra.mxu0 0.0
    %972 = vmatprep.subr.mxu0 0.0
    %973 = vmatpush1.msra.mxu0 0.0
    %974 = vmatprep.subr.mxu0 0.0
    %975 = vmatpush1.msra.mxu0 0.0
    %976 = vmatprep.subr.mxu0 0.0
    %977 = vmatpush1.msra.mxu0 0.0
    %978 = vmatprep.subr.mxu0 0.0
    %979 = vmatpush1.msra.mxu0 0.0
    %980 = vmatprep.subr.mxu0 0.0
    %981 = vmatpush1.msra.mxu0 0.0
    %982 = vmatprep.subr.mxu0 0.0
    %983 = vmatpush1.msra.mxu0 0.0
    %984 = vmatprep.subr.mxu0 0.0
    %985 = vmatpush1.msra.mxu0 0.0
    %986 = vmatprep.subr.mxu0 0.0
    %987 = vmatpush1.msra.mxu0 0.0
    %988 = vmatprep.subr.mxu0 0.0
    %989 = vmatpush1.msra.mxu0 0.0
    %990 = vmatprep.subr.mxu0 0.0
    %991 = vmatpush1.msra.mxu0 0.0
    %992 = vmatprep.subr.mxu0 0.0
    %993 = vmatpush1.msra.mxu0 0.0
    %994 = vmatprep.subr.mxu0 0.0
    %995 = vmatpush1.msra.mxu0 0.0
    %996 = vmatprep.subr.mxu0 0.0
    %997 = vmatpush1.msra.mxu0 0.0
    %998 = vmatprep.mubr.f32.mxu0 0.0
    %999 = vmatmul.mubr.f32.gmra.mrb[0].mxu0 %v908
    %v1000 = vpop.f32.mrb[0].mxu0
    %v1001 = vadd.f32 %v932, %v1000
    %v1002 = vpop.f32.mrb[0].mxu0
    %1003 = vdwg.mxu0
    %v1004 = vmul.f32 %v1001, %v1001
    %vm1005 = vcmask 1041408
    %v1006 = vsel %vm1005, %v1004, 0.0
    %1007 = vadd.xlane.f32.xlu0 %v1006
    %v1008 = vpop.xlane.xlu0 %1007
    %v1009 = vmax.f32 %v1008, 1e-24
    %v1010 = vrsqrt.pop %v1009
    %v1011 = vmul.f32 %v1001, %v1010
    %1012 = vst [vmem:[#allocation10] sm:$0x3] %v1011
    // Predicated region
    $region38: #{tpu_custom_call.1} parent=1 // pred_check
      _
    $region39: #{tpu_custom_call.1} parent=1 // pred_check_branch
      %1014 = sbr.rel (0) target = $region41
    $region40: #{tpu_custom_call.1} parent=1 // pred_region
      %s1016 = ssub.s32 32, 32
      %1017 = vsyncadd [#allocation4], %s1016
      %s1019 = sshll.u32 [#allocation10], 4
      %s1020 = int_to_ptr.vmem [resolvable:$true] %s1019
      %1022 = dma.vmem_to_hbm [thread:$0]  %s1020, 32, %s5, [#allocation4]
    $region41: #{tpu_custom_call.1} parent=1 // pred_fallthru
      _
    // Predicated region
    $region42: #{tpu_custom_call.1} parent=1 // pred_check
      _
    $region43: #{tpu_custom_call.1} parent=1 // pred_check_branch
      %1024 = sbr.rel (0) target = $region45
    $region44: #{tpu_custom_call.1} parent=1 // pred_region
      %1025 = dma.done [#allocation4], 32
    $region45: #{tpu_custom_call.1} parent=1 // pred_fallthru
      _
    %1026 = vsyncpa [#allocation3], 1
    %1027 = vsyncpa [#allocation6], 1
    %1028 = vsyncpa [#allocation9], 1
    %1029 = vsyncpa [#allocation4], 1

</llo_original>
